<compile_context>
chip_gen: v7x
topology: tpu7x:2x2x1
jax: 0.10.0
libtpu: 0.0.40
codegen_flags: <defaults>
</compile_context>

<pallas_src>
import functools
import math

import jax
import jax.numpy as jnp
from jax import lax
from jax.experimental import pallas as pl
from jax.experimental.pallas import tpu as pltpu


# ----------------------------------------------------------------------------
# Sinusoidal timestep embedding (tiny; plain JAX in the wrapper).
# ----------------------------------------------------------------------------
def get_timestep_embedding(timesteps, embedding_dim):
    assert timesteps.ndim == 1
    half_dim = embedding_dim // 2
    scale = math.log(10000.0) / (half_dim - 1)
    freqs = jnp.exp(jnp.arange(half_dim, dtype=jnp.float32) * -scale)
    emb = timesteps.astype(jnp.float32)[:, None] * freqs[None, :]
    emb = jnp.concatenate([jnp.sin(emb), jnp.cos(emb)], axis=1)
    if embedding_dim % 2 == 1:
        emb = jnp.pad(emb, ((0, 0), (0, 1)))
    return emb


# ----------------------------------------------------------------------------
# temb MLP: Linear(128->512) -> silu -> Linear(512->512), one fused kernel.
# Weights arrive pre-cast to bf16 from the wrapper (half the weight DMA).
# ----------------------------------------------------------------------------
def _temb_mlp_kernel(e_ref, w0_ref, b0_ref, w1_ref, b1_ref, out_ref):
    h = jnp.dot(e_ref[...].astype(jnp.bfloat16), w0_ref[...],
                preferred_element_type=jnp.float32) + b0_ref[...]
    h = h * jax.nn.sigmoid(h)                       # nonlinearity(x) = x * sigmoid(x)
    out = jnp.dot(h.astype(jnp.bfloat16), w1_ref[...],
                  preferred_element_type=jnp.float32) + b1_ref[...]
    out_ref[...] = out.astype(out_ref.dtype)


def temb_mlp(emb, w0, b0, w1, b1):
    N, din = emb.shape
    dh = w0.shape[1]
    dout = w1.shape[1]
    return pl.pallas_call(
        _temb_mlp_kernel,
        out_shape=jax.ShapeDtypeStruct((N, dout), jnp.float32),
        grid=(1,),
        in_specs=[
            pl.BlockSpec((N, din), lambda i: (0, 0)),
            pl.BlockSpec((din, dh), lambda i: (0, 0)),
            pl.BlockSpec((1, dh), lambda i: (0, 0)),
            pl.BlockSpec((dh, dout), lambda i: (0, 0)),
            pl.BlockSpec((1, dout), lambda i: (0, 0)),
        ],
        out_specs=pl.BlockSpec((N, dout), lambda i: (0, 0)),
    )(emb, w0.astype(jnp.bfloat16), b0, w1.astype(jnp.bfloat16), b1)


# ----------------------------------------------------------------------------
# VMEM budget / row-tile selection (generation aware: v7x has half the VMEM).
# ----------------------------------------------------------------------------
def _vmem_limit_bytes():
    cap = 128 * 1024 * 1024
    try:
        cap = int(pltpu.get_tpu_info().vmem_capacity_bytes)
    except Exception:
        pass
    return max(16 * 1024 * 1024, min(cap // 2, 64 * 1024 * 1024))


def _pick_row_tile(H, W, Cin, Cout, budget_bytes):
    """Largest TH (TH | H, TH % 8 == 0 or TH == H) whose working set fits VMEM."""
    def need(th):
        in_sc = 2 * (th + 2) * (W + 2) * Cin * 2    # double-buffered bf16 scratch
        out_t = 2 * th * W * Cout * 4               # double-buffered out tile (<= f32)
        acc = 2 * th * W * Cout * 4                 # f32 accumulator + store temp
        im2col = 11 * th * W * Cin * 2              # xp load + 9x patches + temps
        return in_sc + out_t + acc + im2col

    if need(H) <= budget_bytes:
        return H                                    # single full-height tile
    best = None
    for cand in range(8, H, 8):
        if H % cand == 0 and need(cand) <= budget_bytes:
            best = cand
    if best is not None:
        return best
    # TODO(synk): awkward H with no 8-aligned divisor under budget falls back to a
    # single full-height tile, which may exceed VMEM for very large images.
    return H


# ----------------------------------------------------------------------------
# Conv stage: 3x3 conv (im2col, bf16 MXU) + bias + ReLU [+ temb row], H-tiled,
# with a manual double-buffered input-window pipeline.
# ----------------------------------------------------------------------------
def _row_window_copy(x_hbm, xbuf, sem, n, h, slot, th):
    """Async copy of padded rows [h*th, h*th + th + 2) of image n into xbuf[slot]."""
    return pltpu.make_async_copy(
        x_hbm.at[n, pl.ds(h * th, th + 2)], xbuf.at[slot], sem.at[slot])


def _conv_stage_kernel(*refs, th, W, Cin, Cout, n_h, add_temb):
    if add_temb:
        x_hbm, w_ref, b_ref, t_ref, o_ref, xbuf, sem = refs
    else:
        x_hbm, w_ref, b_ref, o_ref, xbuf, sem = refs
        t_ref = None

    n = pl.program_id(0)
    h = pl.program_id(1)
    slot = h % 2

    # ---- P4 input pipeline: one uniform DMA per row tile, double buffered ----
    @pl.when(h == 0)
    def _():                                    # prime this image's chain
        _row_window_copy(x_hbm, xbuf, sem, n, 0, 0, th).start()

    if n_h > 1:
        @pl.when(h + 1 < n_h)
        def _():                                # prefetch the next row tile
            _row_window_copy(x_hbm, xbuf, sem, n, h + 1, 1 - slot, th).start()

    _row_window_copy(x_hbm, xbuf, sem, n, h, slot, th).wait()

    # ---- im2col: one (th*W, 9*Cin) x (9*Cin, Cout) bf16 MXU matmul -----------
    # The W and H halos are already zero in the padded HBM layout, so no
    # concatenation of zero columns / rows is needed here.
    xp = xbuf[slot].reshape(th + 2, W + 2, Cin)
    patches = jnp.concatenate(
        [xp[kh:kh + th, kw:kw + W, :] for kh in range(3) for kw in range(3)],
        axis=-1,
    ).reshape(th * W, 9 * Cin)

    acc = jnp.dot(patches, w_ref[...], preferred_element_type=jnp.float32)
    acc = acc + b_ref[...]                      # conv bias (before ReLU)
    acc = jnp.maximum(acc, 0.0)                 # ReLU
    # TODO(synk): Dropout2d(p=0.1) is identity in eval mode; training-mode
    # per-channel dropout is not implemented.
    if add_temb:
        acc = acc + t_ref[0]                    # temb projection row (after ReLU)

    # Lane-dense store: minor dim is W*Cout.
    o_ref[...] = acc.reshape(1, th, W * Cout).astype(o_ref.dtype)


def conv_stage(x_pad, w_flat, b_row, t_rows, *, H, W, Cin, Cout, add_temb,
               out_dtype, row_tile=None):
    """One ConvBlockTembOneStage.

    x_pad  : (N, H+2, (W+2)*Cin) bf16   halo-padded, lane-dense activations
    w_flat : (9*Cin, Cout)       bf16   conv weight flattened in (kh, kw, ci) order
    b_row  : (1, Cout)           f32    conv bias
    t_rows : (N, 1, Cout)        f32    per-image temb projection (only if add_temb)
    returns (N, H, W*Cout) of out_dtype
    """
    N = x_pad.shape[0]
    assert x_pad.shape == (N, H + 2, (W + 2) * Cin), x_pad.shape

    vmem_limit = _vmem_limit_bytes()
    th = row_tile if row_tile is not None else _pick_row_tile(
        H, W, Cin, Cout, vmem_limit // 2)
    assert H % th == 0 and (th == H or th % 8 == 0), (H, th)
    n_h = H // th

    kernel = functools.partial(_conv_stage_kernel, th=th, W=W, Cin=Cin,
                               Cout=Cout, n_h=n_h, add_temb=add_temb)

    in_specs = [
        pl.BlockSpec(memory_space=pl.ANY),                    # activations stay in HBM
        pl.BlockSpec((9 * Cin, Cout), lambda n, h: (0, 0)),   # VMEM-resident weight
        pl.BlockSpec((1, Cout), lambda n, h: (0, 0)),         # VMEM-resident bias
    ]
    inputs = [x_pad, w_flat, b_row]
    if add_temb:
        in_specs.append(pl.BlockSpec((1, 1, Cout), lambda n, h: (n, 0, 0)))
        inputs.append(t_rows)

    return pl.pallas_call(
        kernel,
        out_shape=jax.ShapeDtypeStruct((N, H, W * Cout), out_dtype),
        grid=(N, n_h),
        in_specs=in_specs,
        out_specs=pl.BlockSpec((1, th, W * Cout), lambda n, h: (n, h, 0)),
        scratch_shapes=[
            pltpu.VMEM((2, th + 2, (W + 2) * Cin), x_pad.dtype),
            pltpu.SemaphoreType.DMA((2,)),
        ],
        compiler_params=pltpu.CompilerParams(
            # h stays "arbitrary": the manual per-image DMA prefetch chain relies on
            # the h iterations of one image running in order on one core.
            dimension_semantics=("parallel", "arbitrary"),
            vmem_limit_bytes=vmem_limit,
        ),
    )(*inputs)


# ----------------------------------------------------------------------------
# ConvBlockTemb and TimeStepEmbedding forward.
# ----------------------------------------------------------------------------
def conv_block_temb_forward(x_nchw, temb, params, *, row_tile=None):
    """ConvBlockTemb.forward(x, temb). x: (N, Cin, H, W); temb: (N, 512) | None."""
    N, C, H, W = x_nchw.shape
    n_stages = len(params["conv_w"])
    silu_temb = None
    if temb is not None and n_stages > 1:
        silu_temb = temb * jax.nn.sigmoid(temb)          # computed once, reused

    def pad_flat(x_nhwc):
        # (N, H, W, C) -> (N, H+2, (W+2)*C) bf16 with the conv's zero halo baked in.
        c = x_nhwc.shape[-1]
        return jnp.pad(x_nhwc, ((0, 0), (1, 1), (1, 1), (0, 0))).reshape(
            N, H + 2, (W + 2) * c)

    x_pad = pad_flat(jnp.transpose(x_nchw, (0, 2, 3, 1)).astype(jnp.bfloat16))

    cin = C
    y = None
    for i in range(n_stages):
        w = params["conv_w"][i]                          # (3, 3, cin, cout) f32
        cout = w.shape[-1]
        w_flat = w.reshape(9 * cin, cout).astype(jnp.bfloat16)
        last = i == n_stages - 1
        add_temb = (not last) and (temb is not None)
        t_rows = None
        if add_temb:
            # Tiny (N,512)x(512,cout) projection: plain XLA, no extra pallas launch.
            t = silu_temb @ params["temb_w"][i] + params["temb_b"][i]
            t_rows = t.reshape(N, 1, cout).astype(jnp.float32)
        y = conv_stage(x_pad, w_flat, params["conv_b"][i], t_rows,
                       H=H, W=W, Cin=cin, Cout=cout, add_temb=add_temb,
                       out_dtype=jnp.float32 if last else jnp.bfloat16,
                       row_tile=row_tile)
        if not last:
            # Re-pad the bf16 activation for the next stage's halo (cheap vs. conv).
            x_pad = pad_flat(y.reshape(N, H, W, cout))
        cin = cout
    return jnp.transpose(y.reshape(N, H, W, cin), (0, 3, 1, 2))   # -> NCHW f32


def timestep_embedding_forward(x_nchw, t, params, image=None, row_tile=None):
    """TimeStepEmbedding.forward(x, t, image) -> (x, temb)."""
    if t is not None:
        emb = get_timestep_embedding(t, 128)
        temb = temb_mlp(emb, params["dense0_w"], params["dense0_b"],
                        params["dense1_w"], params["dense1_b"])
    else:
        temb = None
    if image is not None:
        x_nchw = jnp.concatenate([image, x_nchw], axis=1)
    x = conv_block_temb_forward(x_nchw, temb, params["emb"], row_tile=row_tile)
    return x, temb


# ----------------------------------------------------------------------------
# Parameter construction.
# ----------------------------------------------------------------------------
def init_conv_block_temb_params(key, n_stages, n_filters_in, n_filters_out,
                                temb_dim=512):
    params = {"conv_w": [], "conv_b": [], "temb_w": [], "temb_b": []}
    for i in range(n_stages):
        cin = n_filters_in if i == 0 else n_filters_out
        key, k1, k2, k3, k4 = jax.random.split(key, 5)
        params["conv_w"].append(
            0.1 * jax.random.normal(k1, (3, 3, cin, n_filters_out), jnp.float32))
        params["conv_b"].append(
            0.1 * jax.random.normal(k2, (1, n_filters_out), jnp.float32))
        # TembFusion params exist for every stage (unused on the last stage).
        params["temb_w"].append(
            0.05 * jax.random.normal(k3, (temb_dim, n_filters_out), jnp.float32))
        params["temb_b"].append(
            0.05 * jax.random.normal(k4, (1, n_filters_out), jnp.float32))
    return params


def init_timestep_embedding_params(key, n_filters_in, n_filters_out):
    k0, k1, k2, k3, k4 = jax.random.split(key, 5)
    return {
        "dense0_w": 0.05 * jax.random.normal(k0, (128, 512), jnp.float32),
        "dense0_b": 0.05 * jax.random.normal(k1, (1, 512), jnp.float32),
        "dense1_w": 0.05 * jax.random.normal(k2, (512, 512), jnp.float32),
        "dense1_b": 0.05 * jax.random.normal(k3, (1, 512), jnp.float32),
        "emb": init_conv_block_temb_params(k4, 1, n_filters_in, n_filters_out),
    }


# ----------------------------------------------------------------------------
# Pure-JAX references (emulating the kernels' bf16 operands / rounding points).
# ----------------------------------------------------------------------------
def _round_bf16(a):
    return a.astype(jnp.bfloat16).astype(jnp.float32)


def reference_conv_block(x_nchw, temb, params):
    x = x_nchw
    n_stages = len(params["conv_w"])
    for i in range(n_stages):
        xb = _round_bf16(x)
        wb = _round_bf16(params["conv_w"][i])
        w_oihw = jnp.transpose(wb, (3, 2, 0, 1))
        y = lax.conv_general_dilated(
            xb, w_oihw, window_strides=(1, 1), padding=((1, 1), (1, 1)),
            dimension_numbers=("NCHW", "OIHW", "NCHW"))
        y = y + params["conv_b"][i].reshape(1, -1, 1, 1)
        y = jnp.maximum(y, 0.0)
        if i < n_stages - 1 and temb is not None:
            h = temb * jax.nn.sigmoid(temb)
            t = h @ params["temb_w"][i] + params["temb_b"][i]
            y = y + t[:, :, None, None]
        x = y
    return x


def reference_timestep_embedding(x_nchw, t, params, image=None):
    if t is not None:
        e = get_timestep_embedding(t, 128)
        h = _round_bf16(e) @ _round_bf16(params["dense0_w"]) + params["dense0_b"]
        h = h * jax.nn.sigmoid(h)
        temb = (_round_bf16(h) @ _round_bf16(params["dense1_w"])
                + params["dense1_b"])
    else:
        temb = None
    if image is not None:
        x_nchw = jnp.concatenate([image, x_nchw], axis=1)
    return reference_conv_block(x_nchw, temb, params["emb"]), temb


if __name__ == "__main__":
    key = jax.random.PRNGKey(0)
    kx, kp, kp2, ktv, kx3, kp3 = jax.random.split(key, 6)

    # TimeStepEmbedding(n_filters_in=4, n_filters_out=32), x (2, 4, 16, 16).
    N, Cin, Cout, H, W = 2, 4, 32, 16, 16
    x = jax.random.normal(kx, (N, Cin, H, W), jnp.float32)
    t = jnp.array([3.0, 41.0], jnp.float32)
    params = init_timestep_embedding_params(kp, Cin, Cout)

    out, temb = timestep_embedding_forward(x, t, params)
    out = jax.block_until_ready(out)
    temb = jax.block_until_ready(temb)
    ref_out, ref_temb = reference_timestep_embedding(x, t, params)

    assert out.shape == (N, Cout, H, W), out.shape
    assert temb.shape == (N, 512), temb.shape
    assert jnp.allclose(temb, ref_temb, atol=1e-2, rtol=1e-2), \
        float(jnp.max(jnp.abs(temb - ref_temb)))
    assert jnp.allclose(out, ref_out, atol=1e-2, rtol=1e-2), \
        float(jnp.max(jnp.abs(out - ref_out)))

    # ConvBlockTemb(n_stages=2): exercises the temb-fusion path and bf16 carry.
    params2 = init_conv_block_temb_params(kp2, 2, Cin, Cout)
    temb_vec = jax.random.normal(ktv, (N, 512), jnp.float32)
    out2 = jax.block_until_ready(conv_block_temb_forward(x, temb_vec, params2))
    ref2 = reference_conv_block(x, temb_vec, params2)
    assert out2.shape == (N, Cout, H, W), out2.shape
    assert jnp.allclose(out2, ref2, atol=2e-2, rtol=2e-2), \
        float(jnp.max(jnp.abs(out2 - ref2)))

    # Multi-row-tile path: H=32 with a forced 8-row tile exercises the per-image
    # double-buffered DMA prefetch chain (n_h = 4) and interior/boundary tiles.
    H3 = 32
    x3 = jax.random.normal(kx3, (N, Cin, H3, W), jnp.float32)
    params3 = init_conv_block_temb_params(kp3, 1, Cin, Cout)
    out3 = jax.block_until_ready(
        conv_block_temb_forward(x3, None, params3, row_tile=8))
    ref3 = reference_conv_block(x3, None, params3)
    assert out3.shape == (N, Cout, H3, W), out3.shape
    assert jnp.allclose(out3, ref3, atol=1e-2, rtol=1e-2), \
        float(jnp.max(jnp.abs(out3 - ref3)))

    print("KERNEL_OK")
</pallas_src>

<mosaic_0001>
module attributes {stable_mosaic.version = 11 : i64} {
  func.func @_temb_mlp_kernel(%arg0: i32, %arg1: memref<2x128xf32, #tpu.memory_space<vmem>>, %arg2: memref<128x512xbf16, #tpu.memory_space<vmem>>, %arg3: memref<1x512xf32, #tpu.memory_space<vmem>>, %arg4: memref<512x512xbf16, #tpu.memory_space<vmem>>, %arg5: memref<1x512xf32, #tpu.memory_space<vmem>>, %arg6: memref<2x512xf32, #tpu.memory_space<vmem>>) attributes {dimension_semantics = [#tpu.dimension_semantics<arbitrary>], iteration_bounds = array<i64: 1>, scalar_prefetch = 0 : i64, scratch_operands = 0 : i64, tpu.core_type = #tpu.core_type<tc>, window_params = [{pipeline_mode = #tpu.pipeline_mode<synchronous>, transform_indices = @transform_0, window_bounds = array<i64: 2, 128>}, {pipeline_mode = #tpu.pipeline_mode<synchronous>, transform_indices = @transform_1, window_bounds = array<i64: 128, 512>}, {pipeline_mode = #tpu.pipeline_mode<synchronous>, transform_indices = @transform_2, window_bounds = array<i64: 1, 512>}, {pipeline_mode = #tpu.pipeline_mode<synchronous>, transform_indices = @transform_3, window_bounds = array<i64: 512, 512>}, {pipeline_mode = #tpu.pipeline_mode<synchronous>, transform_indices = @transform_4, window_bounds = array<i64: 1, 512>}, {pipeline_mode = #tpu.pipeline_mode<synchronous>, transform_indices = @transform_5, window_bounds = array<i64: 2, 512>}]} {
    %c0 = arith.constant 0 : index
    %c0_0 = arith.constant 0 : index
    %0 = vector.load %arg1[%c0, %c0_0] : memref<2x128xf32, #tpu.memory_space<vmem>>, vector<2x128xf32>
    %1 = arith.truncf %0 : vector<2x128xf32> to vector<2x128xbf16>
    %c0_1 = arith.constant 0 : index
    %c0_2 = arith.constant 0 : index
    %2 = vector.load %arg2[%c0_1, %c0_2] : memref<128x512xbf16, #tpu.memory_space<vmem>>, vector<128x512xbf16>
    %cst = arith.constant dense<0.000000e+00> : vector<2x512xf32>
    %3 = tpu.matmul %1, %2, %cst {dimension_numbers = #tpu.dot_dimension_numbers<[1], [0], [0], [1], [0, 0, 1, 1], [], []>} : vector<2x128xbf16>, vector<128x512xbf16>, vector<2x512xf32> -> vector<2x512xf32>
    %c0_3 = arith.constant 0 : index
    %c0_4 = arith.constant 0 : index
    %4 = vector.load %arg3[%c0_3, %c0_4] : memref<1x512xf32, #tpu.memory_space<vmem>>, vector<1x512xf32>
    %5 = vector.broadcast %4 : vector<1x512xf32> to vector<2x512xf32>
    %6 = arith.addf %3, %5 : vector<2x512xf32>
    %7 = arith.negf %6 : vector<2x512xf32>
    %8 = math.exp %7 : vector<2x512xf32>
    %cst_5 = arith.constant 1.000000e+00 : f32
    %9 = vector.broadcast %cst_5 : f32 to vector<2x512xf32>
    %10 = arith.addf %9, %8 : vector<2x512xf32>
    %11 = arith.divf %9, %10 : vector<2x512xf32>
    %12 = arith.mulf %6, %11 : vector<2x512xf32>
    %13 = arith.truncf %12 : vector<2x512xf32> to vector<2x512xbf16>
    %c0_6 = arith.constant 0 : index
    %c0_7 = arith.constant 0 : index
    %14 = vector.load %arg4[%c0_6, %c0_7] : memref<512x512xbf16, #tpu.memory_space<vmem>>, vector<512x512xbf16>
    %cst_8 = arith.constant dense<0.000000e+00> : vector<2x512xf32>
    %15 = tpu.matmul %13, %14, %cst_8 {dimension_numbers = #tpu.dot_dimension_numbers<[1], [0], [0], [1], [0, 0, 1, 1], [], []>} : vector<2x512xbf16>, vector<512x512xbf16>, vector<2x512xf32> -> vector<2x512xf32>
    %c0_9 = arith.constant 0 : index
    %c0_10 = arith.constant 0 : index
    %16 = vector.load %arg5[%c0_9, %c0_10] : memref<1x512xf32, #tpu.memory_space<vmem>>, vector<1x512xf32>
    %17 = vector.broadcast %16 : vector<1x512xf32> to vector<2x512xf32>
    %18 = arith.addf %15, %17 : vector<2x512xf32>
    %c0_11 = arith.constant 0 : index
    %c0_12 = arith.constant 0 : index
    %19 = vector.load %arg6[%c0_11, %c0_12] : memref<2x512xf32, #tpu.memory_space<vmem>>, vector<2x512xf32>
    tpu.vector_store %arg6[%c0_11, %c0_12], %18 {strides = array<i32>} : memref<2x512xf32, #tpu.memory_space<vmem>>, vector<2x512xf32>,
    return
  }
  func.func @transform_0(%arg0: i32) -> (i32, i32) {
    %c0_i32 = arith.constant 0 : i32
    %c0_i32_0 = arith.constant 0 : i32
    %c0_i32_1 = arith.constant 0 : i32
    return %c0_i32, %c0_i32_0 : i32, i32
  }
  func.func @transform_1(%arg0: i32) -> (i32, i32) {
    %c0_i32 = arith.constant 0 : i32
    %c0_i32_0 = arith.constant 0 : i32
    %c0_i32_1 = arith.constant 0 : i32
    return %c0_i32, %c0_i32_0 : i32, i32
  }
  func.func @transform_2(%arg0: i32) -> (i32, i32) {
    %c0_i32 = arith.constant 0 : i32
    %c0_i32_0 = arith.constant 0 : i32
    %c0_i32_1 = arith.constant 0 : i32
    return %c0_i32, %c0_i32_0 : i32, i32
  }
  func.func @transform_3(%arg0: i32) -> (i32, i32) {
    %c0_i32 = arith.constant 0 : i32
    %c0_i32_0 = arith.constant 0 : i32
    %c0_i32_1 = arith.constant 0 : i32
    return %c0_i32, %c0_i32_0 : i32, i32
  }
  func.func @transform_4(%arg0: i32) -> (i32, i32) {
    %c0_i32 = arith.constant 0 : i32
    %c0_i32_0 = arith.constant 0 : i32
    %c0_i32_1 = arith.constant 0 : i32
    return %c0_i32, %c0_i32_0 : i32, i32
  }
  func.func @transform_5(%arg0: i32) -> (i32, i32) {
    %c0_i32 = arith.constant 0 : i32
    %c0_i32_0 = arith.constant 0 : i32
    %c0_i32_1 = arith.constant 0 : i32
    return %c0_i32, %c0_i32_0 : i32, i32
  }
}

</mosaic_0001>

<llo_original>
// kernel: tpu_custom_call.1
$region0: #{tpu_custom_call.1}
  #allocation0 [shape = 'u32[]', space=smem, size = 0x4, offset = 0x4, fixed_abs, tag = 'smem constant byte address 0x4 - core index']
  #allocation1 [shape = 'u32[144,128]{1,0:T(1,128)}', space=vmem, size = 0x12000, scoped, tag = 'internal scratch']
  %s0 = inlined_call_operand.hbm [shape: f32[2,128], index: 0, kind: input, shape index: {}]
  %s1 = inlined_call_operand.hbm [shape: bf16[128,512], index: 1, kind: input, shape index: {}]
  %s2 = inlined_call_operand.vmem [shape: f32[1,512], index: 2, kind: input, shape index: {}]
  %s3 = inlined_call_operand.hbm [shape: bf16[512,512], index: 3, kind: input, shape index: {}]
  %s4 = inlined_call_operand.vmem [shape: f32[1,512], index: 4, kind: input, shape index: {}]
  %s5 = inlined_call_operand.hbm [shape: f32[2,512], index: 5, kind: output, shape index: {}]
  %s6 = sld [smem:[#allocation0]]
  $region42: #{tpu_custom_call.1} parent=0
    _
  %s8 = ssub.s32 1, %s6
  %s9 = scalar_select 0, %s8, %s6
  $region1: #{tpu_custom_call.1} parent=0
    #allocation2 [shape = 'u8[1024]{0}', space=vmem, size = 0x400, scoped, tag = 'input window, operand 0, single buffered']
    #allocation3 [shape = 's32[1]{0}', space=sflag, size = 0x4, scoped, tag = 'scoped memory for tpu_custom_call.1']
    #allocation4 [shape = 's32[1]{0}', space=sflag, size = 0x4, scoped, tag = 'scoped memory for tpu_custom_call.1']
    #allocation5 [shape = 'u8[131072]{0}', space=vmem, size = 0x20000, scoped, tag = 'input window, operand 1, single buffered']
    #allocation6 [shape = 's32[1]{0}', space=sflag, size = 0x4, scoped, tag = 'scoped memory for tpu_custom_call.1']
    #allocation7 [shape = 'u8[524288]{0}', space=vmem, size = 0x80000, scoped, tag = 'input window, operand 3, single buffered']
    #allocation8 [shape = 'u8[4096]{0}', space=vmem, size = 0x1000, scoped, tag = 'output window, operand 0, single buffered']
    %10 = vsyncpa [#allocation3], 0
    %11 = vsyncpa [#allocation6], 0
    %12 = vsyncpa [#allocation4], 0
    // Predicated region
    $region2: #{tpu_custom_call.1} parent=1 // pred_check
      _
    $region3: #{tpu_custom_call.1} parent=1 // pred_check_branch
      %14 = sbr.rel (0) target = $region5
    $region4: #{tpu_custom_call.1} parent=1 // pred_region
      %s16 = ssub.s32 32, 32
      %17 = vsyncadd [#allocation3], %s16
      %s19 = sshll.u32 [#allocation2], 4
      %s20 = int_to_ptr.vmem [resolvable:$true] %s19
      %22 = dma.hbm_to_vmem [thread:$0]  %s0, 32, %s20, [#allocation3]
    $region5: #{tpu_custom_call.1} parent=1 // pred_fallthru
      _
    // Predicated region
    $region6: #{tpu_custom_call.1} parent=1 // pred_check
      _
    $region7: #{tpu_custom_call.1} parent=1 // pred_check_branch
      %24 = sbr.rel (0) target = $region9
    $region8: #{tpu_custom_call.1} parent=1 // pred_region
      %s26 = ssub.s32 4096, 4096
      %27 = vsyncadd [#allocation6], %s26
      %s28 = sshll.u32 [#allocation5], 4
      %s29 = int_to_ptr.vmem [resolvable:$true] %s28
      %34 = dma.hbm_to_vmem [thread:$0]  %s1, 4096, %s29, [#allocation6], 256, 256, 16
    $region9: #{tpu_custom_call.1} parent=1 // pred_fallthru
      _
    // Predicated region
    $region10: #{tpu_custom_call.1} parent=1 // pred_check
      _
    $region11: #{tpu_custom_call.1} parent=1 // pred_check_branch
      %36 = sbr.rel (0) target = $region13
    $region12: #{tpu_custom_call.1} parent=1 // pred_region
      _
    $region13: #{tpu_custom_call.1} parent=1 // pred_fallthru
      _
    // Predicated region
    $region14: #{tpu_custom_call.1} parent=1 // pred_check
      _
    $region15: #{tpu_custom_call.1} parent=1 // pred_check_branch
      %38 = sbr.rel (0) target = $region17
    $region16: #{tpu_custom_call.1} parent=1 // pred_region
      %s40 = ssub.s32 16384, 16384
      %41 = vsyncadd [#allocation6], %s40
      %s42 = sshll.u32 [#allocation7], 4
      %s43 = int_to_ptr.vmem [resolvable:$true] %s42
      %48 = dma.hbm_to_vmem [thread:$0]  %s3, 16384, %s43, [#allocation6], 256, 256, 16
    $region17: #{tpu_custom_call.1} parent=1 // pred_fallthru
      _
    // Predicated region
    $region18: #{tpu_custom_call.1} parent=1 // pred_check
      _
    $region19: #{tpu_custom_call.1} parent=1 // pred_check_branch
      %50 = sbr.rel (0) target = $region21
    $region20: #{tpu_custom_call.1} parent=1 // pred_region
      _
    $region21: #{tpu_custom_call.1} parent=1 // pred_fallthru
      _
    // Predicated region
    $region22: #{tpu_custom_call.1} parent=1 // pred_check
      _
    $region23: #{tpu_custom_call.1} parent=1 // pred_check_branch
      %52 = sbr.rel (0) target = $region25
    $region24: #{tpu_custom_call.1} parent=1 // pred_region
      %53 = dma.done [#allocation3], 32
    $region25: #{tpu_custom_call.1} parent=1 // pred_fallthru
      _
    // Predicated region
    $region26: #{tpu_custom_call.1} parent=1 // pred_check
      _
    $region27: #{tpu_custom_call.1} parent=1 // pred_check_branch
      %55 = sbr.rel (0) target = $region29
    $region28: #{tpu_custom_call.1} parent=1 // pred_region
      %56 = dma.done [#allocation6], 4096
    $region29: #{tpu_custom_call.1} parent=1 // pred_fallthru
      _
    // Predicated region
    $region30: #{tpu_custom_call.1} parent=1 // pred_check
      _
    $region31: #{tpu_custom_call.1} parent=1 // pred_check_branch
      %58 = sbr.rel (0) target = $region33
    $region32: #{tpu_custom_call.1} parent=1 // pred_region
      %59 = dma.done [#allocation6], 16384
    $region33: #{tpu_custom_call.1} parent=1 // pred_fallthru
      _
    %v61 = vld [vmem:[#allocation2] sm:$0x3]
    %v62 = vpack.c.bf16 %v61, %v61
    %v63 = vld [vmem:[#allocation5] sm:$0xff]
    %v64 = vld [vmem:[#allocation5 + $0x8] sm:$0xff]
    %v65 = vld [vmem:[#allocation5 + $0x10] sm:$0xff]
    %v66 = vld [vmem:[#allocation5 + $0x18] sm:$0xff]
    %v67 = vld [vmem:[#allocation5 + $0x20] sm:$0xff]
    %v68 = vld [vmem:[#allocation5 + $0x28] sm:$0xff]
    %v69 = vld [vmem:[#allocation5 + $0x30] sm:$0xff]
    %v70 = vld [vmem:[#allocation5 + $0x38] sm:$0xff]
    %v71 = vld [vmem:[#allocation5 + $0x40] sm:$0xff]
    %v72 = vld [vmem:[#allocation5 + $0x48] sm:$0xff]
    %v73 = vld [vmem:[#allocation5 + $0x50] sm:$0xff]
    %v74 = vld [vmem:[#allocation5 + $0x58] sm:$0xff]
    %v75 = vld [vmem:[#allocation5 + $0x60] sm:$0xff]
    %v76 = vld [vmem:[#allocation5 + $0x68] sm:$0xff]
    %v77 = vld [vmem:[#allocation5 + $0x70] sm:$0xff]
    %v78 = vld [vmem:[#allocation5 + $0x78] sm:$0xff]
    %v79 = vld [vmem:[#allocation5 + $0x80] sm:$0xff]
    %v80 = vld [vmem:[#allocation5 + $0x88] sm:$0xff]
    %v81 = vld [vmem:[#allocation5 + $0x90] sm:$0xff]
    %v82 = vld [vmem:[#allocation5 + $0x98] sm:$0xff]
    %v83 = vld [vmem:[#allocation5 + $0xa0] sm:$0xff]
    %v84 = vld [vmem:[#allocation5 + $0xa8] sm:$0xff]
    %v85 = vld [vmem:[#allocation5 + $0xb0] sm:$0xff]
    %v86 = vld [vmem:[#allocation5 + $0xb8] sm:$0xff]
    %v87 = vld [vmem:[#allocation5 + $0xc0] sm:$0xff]
    %v88 = vld [vmem:[#allocation5 + $0xc8] sm:$0xff]
    %v89 = vld [vmem:[#allocation5 + $0xd0] sm:$0xff]
    %v90 = vld [vmem:[#allocation5 + $0xd8] sm:$0xff]
    %v91 = vld [vmem:[#allocation5 + $0xe0] sm:$0xff]
    %v92 = vld [vmem:[#allocation5 + $0xe8] sm:$0xff]
    %v93 = vld [vmem:[#allocation5 + $0xf0] sm:$0xff]
    %v94 = vld [vmem:[#allocation5 + $0xf8] sm:$0xff]
    %v95 = vld [vmem:[%s2] sm:$0xf]
    %v97 = vlaneseq
    %v98 = vshrl.u32 %v97, 7
    %v99 = vsub.s32 0, %v98
    %v100 = vrot.slane %v95, %v99
    %v101 = vlaneseq
    %v102 = vshrl.u32 %v101, 7
    %v103 = vsub.s32 1, %v102
    %v104 = vrot.slane %v95, %v103
    %v105 = vlaneseq
    %v106 = vshrl.u32 %v105, 7
    %v107 = vsub.s32 2, %v106
    %v108 = vrot.slane %v95, %v107
    %v109 = vlaneseq
    %v110 = vshrl.u32 %v109, 7
    %v111 = vsub.s32 3, %v110
    %v112 = vrot.slane %v95, %v111
    %v149 = vunpack.c.l.b16 %v63
    %v150 = vunpack.c.h.b16 %v63
    %v151 = vunpack.c.l.b16 %v64
    %v152 = vunpack.c.h.b16 %v64
    %v153 = vunpack.c.l.b16 %v65
    %v154 = vunpack.c.h.b16 %v65
    %v155 = vunpack.c.l.b16 %v66
    %v156 = vunpack.c.h.b16 %v66
    %v157 = vunpack.c.l.b16 %v67
    %v158 = vunpack.c.h.b16 %v67
    %v159 = vunpack.c.l.b16 %v68
    %v160 = vunpack.c.h.b16 %v68
    %v161 = vunpack.c.l.b16 %v69
    %v162 = vunpack.c.h.b16 %v69
    %v163 = vunpack.c.l.b16 %v70
    %v164 = vunpack.c.h.b16 %v70
    %v165 = vunpack.c.l.b16 %v71
    %v166 = vunpack.c.h.b16 %v71
    %v167 = vunpack.c.l.b16 %v72
    %v168 = vunpack.c.h.b16 %v72
    %v169 = vunpack.c.l.b16 %v73
    %v170 = vunpack.c.h.b16 %v73
    %v171 = vunpack.c.l.b16 %v74
    %v172 = vunpack.c.h.b16 %v74
    %v173 = vunpack.c.l.b16 %v75
    %v174 = vunpack.c.h.b16 %v75
    %v175 = vunpack.c.l.b16 %v76
    %v176 = vunpack.c.h.b16 %v76
    %v177 = vunpack.c.l.b16 %v77
    %v178 = vunpack.c.h.b16 %v77
    %v179 = vunpack.c.l.b16 %v78
    %v180 = vunpack.c.h.b16 %v78
    %v181 = vunpack.c.l.b16 %v79
    %v182 = vunpack.c.h.b16 %v79
    %v183 = vunpack.c.l.b16 %v80
    %v184 = vunpack.c.h.b16 %v80
    %v185 = vunpack.c.l.b16 %v81
    %v186 = vunpack.c.h.b16 %v81
    %v187 = vunpack.c.l.b16 %v82
    %v188 = vunpack.c.h.b16 %v82
    %v189 = vunpack.c.l.b16 %v83
    %v190 = vunpack.c.h.b16 %v83
    %v191 = vunpack.c.l.b16 %v84
    %v192 = vunpack.c.h.b16 %v84
    %v193 = vunpack.c.l.b16 %v85
    %v194 = vunpack.c.h.b16 %v85
    %v195 = vunpack.c.l.b16 %v86
    %v196 = vunpack.c.h.b16 %v86
    %v197 = vunpack.c.l.b16 %v87
    %v198 = vunpack.c.h.b16 %v87
    %v199 = vunpack.c.l.b16 %v88
    %v200 = vunpack.c.h.b16 %v88
    %v201 = vunpack.c.l.b16 %v89
    %v202 = vunpack.c.h.b16 %v89
    %v203 = vunpack.c.l.b16 %v90
    %v204 = vunpack.c.h.b16 %v90
    %v205 = vunpack.c.l.b16 %v91
    %v206 = vunpack.c.h.b16 %v91
    %v207 = vunpack.c.l.b16 %v92
    %v208 = vunpack.c.h.b16 %v92
    %v209 = vunpack.c.l.b16 %v93
    %v210 = vunpack.c.h.b16 %v93
    %v211 = vunpack.c.l.b16 %v94
    %v212 = vunpack.c.h.b16 %v94
    %v213 = vpack.c.b16 %v153, %v149
    %v214 = vpack.c.b16 %v154, %v150
    %v215 = vpack.c.b16 %v155, %v151
    %v216 = vpack.c.b16 %v156, %v152
    %v217 = vpack.c.b16 %v161, %v157
    %v218 = vpack.c.b16 %v162, %v158
    %v219 = vpack.c.b16 %v163, %v159
    %v220 = vpack.c.b16 %v164, %v160
    %v221 = vpack.c.b16 %v169, %v165
    %v222 = vpack.c.b16 %v170, %v166
    %v223 = vpack.c.b16 %v171, %v167
    %v224 = vpack.c.b16 %v172, %v168
    %v225 = vpack.c.b16 %v177, %v173
    %v226 = vpack.c.b16 %v178, %v174
    %v227 = vpack.c.b16 %v179, %v175
    %v228 = vpack.c.b16 %v180, %v176
    %v229 = vpack.c.b16 %v185, %v181
    %v230 = vpack.c.b16 %v186, %v182
    %v231 = vpack.c.b16 %v187, %v183
    %v232 = vpack.c.b16 %v188, %v184
    %v233 = vpack.c.b16 %v193, %v189
    %v234 = vpack.c.b16 %v194, %v190
    %v235 = vpack.c.b16 %v195, %v191
    %v236 = vpack.c.b16 %v196, %v192
    %v237 = vpack.c.b16 %v201, %v197
    %v238 = vpack.c.b16 %v202, %v198
    %v239 = vpack.c.b16 %v203, %v199
    %v240 = vpack.c.b16 %v204, %v200
    %v241 = vpack.c.b16 %v209, %v205
    %v242 = vpack.c.b16 %v210, %v206
    %v243 = vpack.c.b16 %v211, %v207
    %v244 = vpack.c.b16 %v212, %v208
    %277 = vmatprep.subr.bf16.mxu0 %v214
    %278 = vmatpush1.bf16.msra.mxu0 %v213
    %279 = vmatprep.subr.bf16.mxu0 %v218
    %280 = vmatpush1.bf16.msra.mxu0 %v217
    %281 = vmatprep.subr.bf16.mxu0 %v222
    %282 = vmatpush1.bf16.msra.mxu0 %v221
    %283 = vmatprep.subr.bf16.mxu0 %v226
    %284 = vmatpush1.bf16.msra.mxu0 %v225
    %285 = vmatprep.subr.bf16.mxu0 %v230
    %286 = vmatpush1.bf16.msra.mxu0 %v229
    %287 = vmatprep.subr.bf16.mxu0 %v234
    %288 = vmatpush1.bf16.msra.mxu0 %v233
    %289 = vmatprep.subr.bf16.mxu0 %v238
    %290 = vmatpush1.bf16.msra.mxu0 %v237
    %291 = vmatprep.subr.bf16.mxu0 %v242
    %292 = vmatpush1.bf16.msra.mxu0 %v241
    %293 = vmatprep.subr.bf16.mxu0 0
    %294 = vmatpush1.bf16.msra.mxu0 0
    %295 = vmatprep.subr.bf16.mxu0 0
    %296 = vmatpush1.bf16.msra.mxu0 0
    %297 = vmatprep.subr.bf16.mxu0 0
    %298 = vmatpush1.bf16.msra.mxu0 0
    %299 = vmatprep.subr.bf16.mxu0 0
    %300 = vmatpush1.bf16.msra.mxu0 0
    %301 = vmatprep.subr.bf16.mxu0 0
    %302 = vmatpush1.bf16.msra.mxu0 0
    %303 = vmatprep.subr.bf16.mxu0 0
    %304 = vmatpush1.bf16.msra.mxu0 0
    %305 = vmatprep.subr.bf16.mxu0 0
    %306 = vmatpush1.bf16.msra.mxu0 0
    %307 = vmatprep.subr.bf16.mxu0 0
    %308 = vmatpush1.bf16.msra.mxu0 0
    %309 = vmatprep.mubr.bf16.mxu0 0
    %310 = vmatmul.mubr.bf16.gmra.mrb[0].mxu0 %v62
    %v311 = vpop.f32.mrb[0].mxu0
    %v312 = vadd.f32 %v100, %v311
    %v313 = vpop.f32.mrb[0].mxu0
    %v314 = vadd.f32 %v104, %v313
    %v315 = vpop.f32.mrb[0].mxu0
    %v316 = vpop.f32.mrb[0].mxu0
    %317 = vdwg.mxu0
    %318 = vmatprep.subr.bf16.mxu0 %v216
    %319 = vmatpush1.bf16.msra.mxu0 %v215
    %320 = vmatprep.subr.bf16.mxu0 %v220
    %321 = vmatpush1.bf16.msra.mxu0 %v219
    %322 = vmatprep.subr.bf16.mxu0 %v224
    %323 = vmatpush1.bf16.msra.mxu0 %v223
    %324 = vmatprep.subr.bf16.mxu0 %v228
    %325 = vmatpush1.bf16.msra.mxu0 %v227
    %326 = vmatprep.subr.bf16.mxu0 %v232
    %327 = vmatpush1.bf16.msra.mxu0 %v231
    %328 = vmatprep.subr.bf16.mxu0 %v236
    %329 = vmatpush1.bf16.msra.mxu0 %v235
    %330 = vmatprep.subr.bf16.mxu0 %v240
    %331 = vmatpush1.bf16.msra.mxu0 %v239
    %332 = vmatprep.subr.bf16.mxu0 %v244
    %333 = vmatpush1.bf16.msra.mxu0 %v243
    %334 = vmatprep.subr.bf16.mxu0 0
    %335 = vmatpush1.bf16.msra.mxu0 0
    %336 = vmatprep.subr.bf16.mxu0 0
    %337 = vmatpush1.bf16.msra.mxu0 0
    %338 = vmatprep.subr.bf16.mxu0 0
    %339 = vmatpush1.bf16.msra.mxu0 0
    %340 = vmatprep.subr.bf16.mxu0 0
    %341 = vmatpush1.bf16.msra.mxu0 0
    %342 = vmatprep.subr.bf16.mxu0 0
    %343 = vmatpush1.bf16.msra.mxu0 0
    %344 = vmatprep.subr.bf16.mxu0 0
    %345 = vmatpush1.bf16.msra.mxu0 0
    %346 = vmatprep.subr.bf16.mxu0 0
    %347 = vmatpush1.bf16.msra.mxu0 0
    %348 = vmatprep.subr.bf16.mxu0 0
    %349 = vmatpush1.bf16.msra.mxu0 0
    %350 = vmatprep.mubr.bf16.mxu0 0
    %351 = vmatmul.mubr.bf16.gmra.mrb[0].mxu0 %v62
    %v352 = vpop.f32.mrb[0].mxu0
    %v353 = vadd.f32 %v108, %v352
    %v354 = vpop.f32.mrb[0].mxu0
    %v355 = vadd.f32 %v112, %v354
    %v356 = vpop.f32.mrb[0].mxu0
    %v357 = vpop.f32.mrb[0].mxu0
    %358 = vdwg.mxu0
    %v359 = vxor.u32 %v312, 2147483648
    %v360 = vxor.u32 %v314, 2147483648
    %v361 = vxor.u32 %v353, 2147483648
    %v362 = vxor.u32 %v355, 2147483648
    %v363 = vmul.f32 %v359, 1.442695
    %v364 = vpow.pop %v363
    %v365 = vmul.f32 %v360, 1.442695
    %v366 = vpow.pop %v365
    %v367 = vmul.f32 %v361, 1.442695
    %v368 = vpow.pop %v367
    %v369 = vmul.f32 %v362, 1.442695
    %v370 = vpow.pop %v369
    %v371 = vadd.f32 %v364, 1.0
    %v372 = vadd.f32 %v366, 1.0
    %v373 = vadd.f32 %v368, 1.0
    %v374 = vadd.f32 %v370, 1.0
    %v375 = vrcp.pop %v371
    %v376 = vmul.f32 1.0, %v375
    %v377 = vrcp.pop %v372
    %v378 = vmul.f32 1.0, %v377
    %v379 = vrcp.pop %v373
    %v380 = vmul.f32 1.0, %v379
    %v381 = vrcp.pop %v374
    %v382 = vmul.f32 1.0, %v381
    %v383 = vmul.f32 %v312, %v376
    %v384 = vmul.f32 %v314, %v378
    %v385 = vmul.f32 %v353, %v380
    %v386 = vmul.f32 %v355, %v382
    %v387 = vpack.c.bf16 %v383, %v383
    %v388 = vpack.c.bf16 %v384, %v384
    %v389 = vpack.c.bf16 %v385, %v385
    %v390 = vpack.c.bf16 %v386, %v386
    %v391 = vld [vmem:[#allocation7] sm:$0xff]
    %v392 = vld [vmem:[#allocation7 + $0x8] sm:$0xff]
    %v393 = vld [vmem:[#allocation7 + $0x10] sm:$0xff]
    %v394 = vld [vmem:[#allocation7 + $0x18] sm:$0xff]
    %v395 = vld [vmem:[#allocation7 + $0x20] sm:$0xff]
    %v396 = vld [vmem:[#allocation7 + $0x28] sm:$0xff]
    %v397 = vld [vmem:[#allocation7 + $0x30] sm:$0xff]
    %v398 = vld [vmem:[#allocation7 + $0x38] sm:$0xff]
    %v399 = vld [vmem:[#allocation7 + $0x40] sm:$0xff]
    %v400 = vld [vmem:[#allocation7 + $0x48] sm:$0xff]
    %v401 = vld [vmem:[#allocation7 + $0x50] sm:$0xff]
    %v402 = vld [vmem:[#allocation7 + $0x58] sm:$0xff]
    %v403 = vld [vmem:[#allocation7 + $0x60] sm:$0xff]
    %v404 = vld [vmem:[#allocation7 + $0x68] sm:$0xff]
    %v405 = vld [vmem:[#allocation7 + $0x70] sm:$0xff]
    %v406 = vld [vmem:[#allocation7 + $0x78] sm:$0xff]
    %v407 = vld [vmem:[#allocation7 + $0x80] sm:$0xff]
    %v408 = vld [vmem:[#allocation7 + $0x88] sm:$0xff]
    %v409 = vld [vmem:[#allocation7 + $0x90] sm:$0xff]
    %v410 = vld [vmem:[#allocation7 + $0x98] sm:$0xff]
    %v411 = vld [vmem:[#allocation7 + $0xa0] sm:$0xff]
    %v412 = vld [vmem:[#allocation7 + $0xa8] sm:$0xff]
    %v413 = vld [vmem:[#allocation7 + $0xb0] sm:$0xff]
    %v414 = vld [vmem:[#allocation7 + $0xb8] sm:$0xff]
    %v415 = vld [vmem:[#allocation7 + $0xc0] sm:$0xff]
    %v416 = vld [vmem:[#allocation7 + $0xc8] sm:$0xff]
    %v417 = vld [vmem:[#allocation7 + $0xd0] sm:$0xff]
    %v418 = vld [vmem:[#allocation7 + $0xd8] sm:$0xff]
    %v419 = vld [vmem:[#allocation7 + $0xe0] sm:$0xff]
    %v420 = vld [vmem:[#allocation7 + $0xe8] sm:$0xff]
    %v421 = vld [vmem:[#allocation7 + $0xf0] sm:$0xff]
    %v422 = vld [vmem:[#allocation7 + $0xf8] sm:$0xff]
    %v423 = vld [vmem:[#allocation7 + $0x100] sm:$0xff]
    %v424 = vld [vmem:[#allocation7 + $0x108] sm:$0xff]
    %v425 = vld [vmem:[#allocation7 + $0x110] sm:$0xff]
    %v426 = vld [vmem:[#allocation7 + $0x118] sm:$0xff]
    %v427 = vld [vmem:[#allocation7 + $0x120] sm:$0xff]
    %v428 = vld [vmem:[#allocation7 + $0x128] sm:$0xff]
    %v429 = vld [vmem:[#allocation7 + $0x130] sm:$0xff]
    %v430 = vld [vmem:[#allocation7 + $0x138] sm:$0xff]
    %v431 = vld [vmem:[#allocation7 + $0x140] sm:$0xff]
    %v432 = vld [vmem:[#allocation7 + $0x148] sm:$0xff]
    %v433 = vld [vmem:[#allocation7 + $0x150] sm:$0xff]
    %v434 = vld [vmem:[#allocation7 + $0x158] sm:$0xff]
    %v435 = vld [vmem:[#allocation7 + $0x160] sm:$0xff]
    %v436 = vld [vmem:[#allocation7 + $0x168] sm:$0xff]
    %v437 = vld [vmem:[#allocation7 + $0x170] sm:$0xff]
    %v438 = vld [vmem:[#allocation7 + $0x178] sm:$0xff]
    %v439 = vld [vmem:[#allocation7 + $0x180] sm:$0xff]
    %v440 = vld [vmem:[#allocation7 + $0x188] sm:$0xff]
    %v441 = vld [vmem:[#allocation7 + $0x190] sm:$0xff]
    %v442 = vld [vmem:[#allocation7 + $0x198] sm:$0xff]
    %v443 = vld [vmem:[#allocation7 + $0x1a0] sm:$0xff]
    %v444 = vld [vmem:[#allocation7 + $0x1a8] sm:$0xff]
    %v445 = vld [vmem:[#allocation7 + $0x1b0] sm:$0xff]
    %v446 = vld [vmem:[#allocation7 + $0x1b8] sm:$0xff]
    %v447 = vld [vmem:[#allocation7 + $0x1c0] sm:$0xff]
    %v448 = vld [vmem:[#allocation7 + $0x1c8] sm:$0xff]
    %v449 = vld [vmem:[#allocation7 + $0x1d0] sm:$0xff]
    %v450 = vld [vmem:[#allocation7 + $0x1d8] sm:$0xff]
    %v451 = vld [vmem:[#allocation7 + $0x1e0] sm:$0xff]
    %v452 = vld [vmem:[#allocation7 + $0x1e8] sm:$0xff]
    %v453 = vld [vmem:[#allocation7 + $0x1f0] sm:$0xff]
    %v454 = vld [vmem:[#allocation7 + $0x1f8] sm:$0xff]
    %v455 = vld [vmem:[#allocation7 + $0x200] sm:$0xff]
    %v456 = vld [vmem:[#allocation7 + $0x208] sm:$0xff]
    %v457 = vld [vmem:[#allocation7 + $0x210] sm:$0xff]
    %v458 = vld [vmem:[#allocation7 + $0x218] sm:$0xff]
    %v459 = vld [vmem:[#allocation7 + $0x220] sm:$0xff]
    %v460 = vld [vmem:[#allocation7 + $0x228] sm:$0xff]
    %v461 = vld [vmem:[#allocation7 + $0x230] sm:$0xff]
    %v462 = vld [vmem:[#allocation7 + $0x238] sm:$0xff]
    %v463 = vld [vmem:[#allocation7 + $0x240] sm:$0xff]
    %v464 = vld [vmem:[#allocation7 + $0x248] sm:$0xff]
    %v465 = vld [vmem:[#allocation7 + $0x250] sm:$0xff]
    %v466 = vld [vmem:[#allocation7 + $0x258] sm:$0xff]
    %v467 = vld [vmem:[#allocation7 + $0x260] sm:$0xff]
    %v468 = vld [vmem:[#allocation7 + $0x268] sm:$0xff]
    %v469 = vld [vmem:[#allocation7 + $0x270] sm:$0xff]
    %v470 = vld [vmem:[#allocation7 + $0x278] sm:$0xff]
    %v471 = vld [vmem:[#allocation7 + $0x280] sm:$0xff]
    %v472 = vld [vmem:[#allocation7 + $0x288] sm:$0xff]
    %v473 = vld [vmem:[#allocation7 + $0x290] sm:$0xff]
    %v474 = vld [vmem:[#allocation7 + $0x298] sm:$0xff]
    %v475 = vld [vmem:[#allocation7 + $0x2a0] sm:$0xff]
    %v476 = vld [vmem:[#allocation7 + $0x2a8] sm:$0xff]
    %v477 = vld [vmem:[#allocation7 + $0x2b0] sm:$0xff]
    %v478 = vld [vmem:[#allocation7 + $0x2b8] sm:$0xff]
    %v479 = vld [vmem:[#allocation7 + $0x2c0] sm:$0xff]
    %v480 = vld [vmem:[#allocation7 + $0x2c8] sm:$0xff]
    %v481 = vld [vmem:[#allocation7 + $0x2d0] sm:$0xff]
    %v482 = vld [vmem:[#allocation7 + $0x2d8] sm:$0xff]
    %v483 = vld [vmem:[#allocation7 + $0x2e0] sm:$0xff]
    %v484 = vld [vmem:[#allocation7 + $0x2e8] sm:$0xff]
    %v485 = vld [vmem:[#allocation7 + $0x2f0] sm:$0xff]
    %v486 = vld [vmem:[#allocation7 + $0x2f8] sm:$0xff]
    %v487 = vld [vmem:[#allocation7 + $0x300] sm:$0xff]
    %v488 = vld [vmem:[#allocation7 + $0x308] sm:$0xff]
    %v489 = vld [vmem:[#allocation7 + $0x310] sm:$0xff]
    %v490 = vld [vmem:[#allocation7 + $0x318] sm:$0xff]
    %v491 = vld [vmem:[#allocation7 + $0x320] sm:$0xff]
    %v492 = vld [vmem:[#allocation7 + $0x328] sm:$0xff]
    %v493 = vld [vmem:[#allocation7 + $0x330] sm:$0xff]
    %v494 = vld [vmem:[#allocation7 + $0x338] sm:$0xff]
    %v495 = vld [vmem:[#allocation7 + $0x340] sm:$0xff]
    %v496 = vld [vmem:[#allocation7 + $0x348] sm:$0xff]
    %v497 = vld [vmem:[#allocation7 + $0x350] sm:$0xff]
    %v498 = vld [vmem:[#allocation7 + $0x358] sm:$0xff]
    %v499 = vld [vmem:[#allocation7 + $0x360] sm:$0xff]
    %v500 = vld [vmem:[#allocation7 + $0x368] sm:$0xff]
    %v501 = vld [vmem:[#allocation7 + $0x370] sm:$0xff]
    %v502 = vld [vmem:[#allocation7 + $0x378] sm:$0xff]
    %v503 = vld [vmem:[#allocation7 + $0x380] sm:$0xff]
    %v504 = vld [vmem:[#allocation7 + $0x388] sm:$0xff]
    %v505 = vld [vmem:[#allocation7 + $0x390] sm:$0xff]
    %v506 = vld [vmem:[#allocation7 + $0x398] sm:$0xff]
    %v507 = vld [vmem:[#allocation7 + $0x3a0] sm:$0xff]
    %v508 = vld [vmem:[#allocation7 + $0x3a8] sm:$0xff]
    %v509 = vld [vmem:[#allocation7 + $0x3b0] sm:$0xff]
    %v510 = vld [vmem:[#allocation7 + $0x3b8] sm:$0xff]
    %v511 = vld [vmem:[#allocation7 + $0x3c0] sm:$0xff]
    %v512 = vld [vmem:[#allocation7 + $0x3c8] sm:$0xff]
    %v513 = vld [vmem:[#allocation7 + $0x3d0] sm:$0xff]
    %v514 = vld [vmem:[#allocation7 + $0x3d8] sm:$0xff]
    %v515 = vld [vmem:[#allocation7 + $0x3e0] sm:$0xff]
    %v516 = vld [vmem:[#allocation7 + $0x3e8] sm:$0xff]
    %v517 = vld [vmem:[#allocation7 + $0x3f0] sm:$0xff]
    %v518 = vld [vmem:[#allocation7 + $0x3f8] sm:$0xff]
    %v519 = vld [vmem:[%s4] sm:$0xf]
    %v521 = vlaneseq
    %v522 = vshrl.u32 %v521, 7
    %v523 = vsub.s32 0, %v522
    %v524 = vrot.slane %v519, %v523
    %v525 = vlaneseq
    %v526 = vshrl.u32 %v525, 7
    %v527 = vsub.s32 1, %v526
    %v528 = vrot.slane %v519, %v527
    %v529 = vlaneseq
    %v530 = vshrl.u32 %v529, 7
    %v531 = vsub.s32 2, %v530
    %v532 = vrot.slane %v519, %v531
    %v533 = vlaneseq
    %v534 = vshrl.u32 %v533, 7
    %v535 = vsub.s32 3, %v534
    %v536 = vrot.slane %v519, %v535
    %v669 = vunpack.c.l.b16 %v391
    %v670 = vunpack.c.h.b16 %v391
    %v671 = vunpack.c.l.b16 %v392
    %v672 = vunpack.c.h.b16 %v392
    %v673 = vunpack.c.l.b16 %v393
    %v674 = vunpack.c.h.b16 %v393
    %v675 = vunpack.c.l.b16 %v394
    %v676 = vunpack.c.h.b16 %v394
    %v677 = vunpack.c.l.b16 %v395
    %v678 = vunpack.c.h.b16 %v395
    %v679 = vunpack.c.l.b16 %v396
    %v680 = vunpack.c.h.b16 %v396
    %v681 = vunpack.c.l.b16 %v397
    %v682 = vunpack.c.h.b16 %v397
    %v683 = vunpack.c.l.b16 %v398
    %v684 = vunpack.c.h.b16 %v398
    %v685 = vunpack.c.l.b16 %v399
    %v686 = vunpack.c.h.b16 %v399
    %v687 = vunpack.c.l.b16 %v400
    %v688 = vunpack.c.h.b16 %v400
    %v689 = vunpack.c.l.b16 %v401
    %v690 = vunpack.c.h.b16 %v401
    %v691 = vunpack.c.l.b16 %v402
    %v692 = vunpack.c.h.b16 %v402
    %v693 = vunpack.c.l.b16 %v403
    %v694 = vunpack.c.h.b16 %v403
    %v695 = vunpack.c.l.b16 %v404
    %v696 = vunpack.c.h.b16 %v404
    %v697 = vunpack.c.l.b16 %v405
    %v698 = vunpack.c.h.b16 %v405
    %v699 = vunpack.c.l.b16 %v406
    %v700 = vunpack.c.h.b16 %v406
    %v701 = vunpack.c.l.b16 %v407
    %v702 = vunpack.c.h.b16 %v407
    %v703 = vunpack.c.l.b16 %v408
    %v704 = vunpack.c.h.b16 %v408
    %v705 = vunpack.c.l.b16 %v409
    %v706 = vunpack.c.h.b16 %v409
    %v707 = vunpack.c.l.b16 %v410
    %v708 = vunpack.c.h.b16 %v410
    %v709 = vunpack.c.l.b16 %v411
    %v710 = vunpack.c.h.b16 %v411
    %v711 = vunpack.c.l.b16 %v412
    %v712 = vunpack.c.h.b16 %v412
    %v713 = vunpack.c.l.b16 %v413
    %v714 = vunpack.c.h.b16 %v413
    %v715 = vunpack.c.l.b16 %v414
    %v716 = vunpack.c.h.b16 %v414
    %v717 = vunpack.c.l.b16 %v415
    %v718 = vunpack.c.h.b16 %v415
    %v719 = vunpack.c.l.b16 %v416
    %v720 = vunpack.c.h.b16 %v416
    %v721 = vunpack.c.l.b16 %v417
    %v722 = vunpack.c.h.b16 %v417
    %v723 = vunpack.c.l.b16 %v418
    %v724 = vunpack.c.h.b16 %v418
    %v725 = vunpack.c.l.b16 %v419
    %v726 = vunpack.c.h.b16 %v419
    %v727 = vunpack.c.l.b16 %v420
    %v728 = vunpack.c.h.b16 %v420
    %v729 = vunpack.c.l.b16 %v421
    %v730 = vunpack.c.h.b16 %v421
    %v731 = vunpack.c.l.b16 %v422
    %v732 = vunpack.c.h.b16 %v422
    %v733 = vunpack.c.l.b16 %v423
    %v734 = vunpack.c.h.b16 %v423
    %v735 = vunpack.c.l.b16 %v424
    %v736 = vunpack.c.h.b16 %v424
    %v737 = vunpack.c.l.b16 %v425
    %v738 = vunpack.c.h.b16 %v425
    %v739 = vunpack.c.l.b16 %v426
    %v740 = vunpack.c.h.b16 %v426
    %v741 = vunpack.c.l.b16 %v427
    %v742 = vunpack.c.h.b16 %v427
    %v743 = vunpack.c.l.b16 %v428
    %v744 = vunpack.c.h.b16 %v428
    %v745 = vunpack.c.l.b16 %v429
    %v746 = vunpack.c.h.b16 %v429
    %v747 = vunpack.c.l.b16 %v430
    %v748 = vunpack.c.h.b16 %v430
    %v749 = vunpack.c.l.b16 %v431
    %v750 = vunpack.c.h.b16 %v431
    %v751 = vunpack.c.l.b16 %v432
    %v752 = vunpack.c.h.b16 %v432
    %v753 = vunpack.c.l.b16 %v433
    %v754 = vunpack.c.h.b16 %v433
    %v755 = vunpack.c.l.b16 %v434
    %v756 = vunpack.c.h.b16 %v434
    %v757 = vunpack.c.l.b16 %v435
    %v758 = vunpack.c.h.b16 %v435
    %v759 = vunpack.c.l.b16 %v436
    %v760 = vunpack.c.h.b16 %v436
    %v761 = vunpack.c.l.b16 %v437
    %v762 = vunpack.c.h.b16 %v437
    %v763 = vunpack.c.l.b16 %v438
    %v764 = vunpack.c.h.b16 %v438
    %v765 = vunpack.c.l.b16 %v439
    %v766 = vunpack.c.h.b16 %v439
    %v767 = vunpack.c.l.b16 %v440
    %v768 = vunpack.c.h.b16 %v440
    %v769 = vunpack.c.l.b16 %v441
    %v770 = vunpack.c.h.b16 %v441
    %v771 = vunpack.c.l.b16 %v442
    %v772 = vunpack.c.h.b16 %v442
    %v773 = vunpack.c.l.b16 %v443
    %v774 = vunpack.c.h.b16 %v443
    %v775 = vunpack.c.l.b16 %v444
    %v776 = vunpack.c.h.b16 %v444
    %v777 = vunpack.c.l.b16 %v445
    %v778 = vunpack.c.h.b16 %v445
    %v779 = vunpack.c.l.b16 %v446
    %v780 = vunpack.c.h.b16 %v446
    %v781 = vunpack.c.l.b16 %v447
    %v782 = vunpack.c.h.b16 %v447
    %v783 = vunpack.c.l.b16 %v448
    %v784 = vunpack.c.h.b16 %v448
    %v785 = vunpack.c.l.b16 %v449
    %v786 = vunpack.c.h.b16 %v449
    %v787 = vunpack.c.l.b16 %v450
    %v788 = vunpack.c.h.b16 %v450
    %v789 = vunpack.c.l.b16 %v451
    %v790 = vunpack.c.h.b16 %v451
    %v791 = vunpack.c.l.b16 %v452
    %v792 = vunpack.c.h.b16 %v452
    %v793 = vunpack.c.l.b16 %v453
    %v794 = vunpack.c.h.b16 %v453
    %v795 = vunpack.c.l.b16 %v454
    %v796 = vunpack.c.h.b16 %v454
    %v797 = vunpack.c.l.b16 %v455
    %v798 = vunpack.c.h.b16 %v455
    %v799 = vunpack.c.l.b16 %v456
    %v800 = vunpack.c.h.b16 %v456
    %v801 = vunpack.c.l.b16 %v457
    %v802 = vunpack.c.h.b16 %v457
    %v803 = vunpack.c.l.b16 %v458
    %v804 = vunpack.c.h.b16 %v458
    %v805 = vunpack.c.l.b16 %v459
    %v806 = vunpack.c.h.b16 %v459
    %v807 = vunpack.c.l.b16 %v460
    %v808 = vunpack.c.h.b16 %v460
    %v809 = vunpack.c.l.b16 %v461
    %v810 = vunpack.c.h.b16 %v461
    %v811 = vunpack.c.l.b16 %v462
    %v812 = vunpack.c.h.b16 %v462
    %v813 = vunpack.c.l.b16 %v463
    %v814 = vunpack.c.h.b16 %v463
    %v815 = vunpack.c.l.b16 %v464
    %v816 = vunpack.c.h.b16 %v464
    %v817 = vunpack.c.l.b16 %v465
    %v818 = vunpack.c.h.b16 %v465
    %v819 = vunpack.c.l.b16 %v466
    %v820 = vunpack.c.h.b16 %v466
    %v821 = vunpack.c.l.b16 %v467
    %v822 = vunpack.c.h.b16 %v467
    %v823 = vunpack.c.l.b16 %v468
    %v824 = vunpack.c.h.b16 %v468
    %v825 = vunpack.c.l.b16 %v469
    %v826 = vunpack.c.h.b16 %v469
    %v827 = vunpack.c.l.b16 %v470
    %v828 = vunpack.c.h.b16 %v470
    %v829 = vunpack.c.l.b16 %v471
    %v830 = vunpack.c.h.b16 %v471
    %v831 = vunpack.c.l.b16 %v472
    %v832 = vunpack.c.h.b16 %v472
    %v833 = vunpack.c.l.b16 %v473
    %v834 = vunpack.c.h.b16 %v473
    %v835 = vunpack.c.l.b16 %v474
    %v836 = vunpack.c.h.b16 %v474
    %v837 = vunpack.c.l.b16 %v475
    %v838 = vunpack.c.h.b16 %v475
    %v839 = vunpack.c.l.b16 %v476
    %v840 = vunpack.c.h.b16 %v476
    %v841 = vunpack.c.l.b16 %v477
    %v842 = vunpack.c.h.b16 %v477
    %v843 = vunpack.c.l.b16 %v478
    %v844 = vunpack.c.h.b16 %v478
    %v845 = vunpack.c.l.b16 %v479
    %v846 = vunpack.c.h.b16 %v479
    %v847 = vunpack.c.l.b16 %v480
    %v848 = vunpack.c.h.b16 %v480
    %v849 = vunpack.c.l.b16 %v481
    %v850 = vunpack.c.h.b16 %v481
    %v851 = vunpack.c.l.b16 %v482
    %v852 = vunpack.c.h.b16 %v482
    %v853 = vunpack.c.l.b16 %v483
    %v854 = vunpack.c.h.b16 %v483
    %v855 = vunpack.c.l.b16 %v484
    %v856 = vunpack.c.h.b16 %v484
    %v857 = vunpack.c.l.b16 %v485
    %v858 = vunpack.c.h.b16 %v485
    %v859 = vunpack.c.l.b16 %v486
    %v860 = vunpack.c.h.b16 %v486
    %v861 = vunpack.c.l.b16 %v487
    %v862 = vunpack.c.h.b16 %v487
    %v863 = vunpack.c.l.b16 %v488
    %v864 = vunpack.c.h.b16 %v488
    %v865 = vunpack.c.l.b16 %v489
    %v866 = vunpack.c.h.b16 %v489
    %v867 = vunpack.c.l.b16 %v490
    %v868 = vunpack.c.h.b16 %v490
    %v869 = vunpack.c.l.b16 %v491
    %v870 = vunpack.c.h.b16 %v491
    %v871 = vunpack.c.l.b16 %v492
    %v872 = vunpack.c.h.b16 %v492
    %v873 = vunpack.c.l.b16 %v493
    %v874 = vunpack.c.h.b16 %v493
    %v875 = vunpack.c.l.b16 %v494
    %v876 = vunpack.c.h.b16 %v494
    %v877 = vunpack.c.l.b16 %v495
    %v878 = vunpack.c.h.b16 %v495
    %v879 = vunpack.c.l.b16 %v496
    %v880 = vunpack.c.h.b16 %v496
    %v881 = vunpack.c.l.b16 %v497
    %v882 = vunpack.c.h.b16 %v497
    %v883 = vunpack.c.l.b16 %v498
    %v884 = vunpack.c.h.b16 %v498
    %v885 = vunpack.c.l.b16 %v499
    %v886 = vunpack.c.h.b16 %v499
    %v887 = vunpack.c.l.b16 %v500
    %v888 = vunpack.c.h.b16 %v500
    %v889 = vunpack.c.l.b16 %v501
    %v890 = vunpack.c.h.b16 %v501
    %v891 = vunpack.c.l.b16 %v502
    %v892 = vunpack.c.h.b16 %v502
    %v893 = vunpack.c.l.b16 %v503
    %v894 = vunpack.c.h.b16 %v503
    %v895 = vunpack.c.l.b16 %v504
    %v896 = vunpack.c.h.b16 %v504
    %v897 = vunpack.c.l.b16 %v505
    %v898 = vunpack.c.h.b16 %v505
    %v899 = vunpack.c.l.b16 %v506
    %v900 = vunpack.c.h.b16 %v506
    %v901 = vunpack.c.l.b16 %v507
    %v902 = vunpack.c.h.b16 %v507
    %v903 = vunpack.c.l.b16 %v508
    %v904 = vunpack.c.h.b16 %v508
    %v905 = vunpack.c.l.b16 %v509
    %v906 = vunpack.c.h.b16 %v509
    %v907 = vunpack.c.l.b16 %v510
    %v908 = vunpack.c.h.b16 %v510
    %v909 = vunpack.c.l.b16 %v511
    %v910 = vunpack.c.h.b16 %v511
    %v911 = vunpack.c.l.b16 %v512
    %v912 = vunpack.c.h.b16 %v512
    %v913 = vunpack.c.l.b16 %v513
    %v914 = vunpack.c.h.b16 %v513
    %v915 = vunpack.c.l.b16 %v514
    %v916 = vunpack.c.h.b16 %v514
    %v917 = vunpack.c.l.b16 %v515
    %v918 = vunpack.c.h.b16 %v515
    %v919 = vunpack.c.l.b16 %v516
    %v920 = vunpack.c.h.b16 %v516
    %v921 = vunpack.c.l.b16 %v517
    %v922 = vunpack.c.h.b16 %v517
    %v923 = vunpack.c.l.b16 %v518
    %v924 = vunpack.c.h.b16 %v518
    %v925 = vpack.c.b16 %v673, %v669
    %v926 = vpack.c.b16 %v674, %v670
    %v927 = vpack.c.b16 %v675, %v671
    %v928 = vpack.c.b16 %v676, %v672
    %v929 = vpack.c.b16 %v681, %v677
    %v930 = vpack.c.b16 %v682, %v678
    %v931 = vpack.c.b16 %v683, %v679
    %v932 = vpack.c.b16 %v684, %v680
    %v933 = vpack.c.b16 %v689, %v685
    %v934 = vpack.c.b16 %v690, %v686
    %v935 = vpack.c.b16 %v691, %v687
    %v936 = vpack.c.b16 %v692, %v688
    %v937 = vpack.c.b16 %v697, %v693
    %v938 = vpack.c.b16 %v698, %v694
    %v939 = vpack.c.b16 %v699, %v695
    %v940 = vpack.c.b16 %v700, %v696
    %v941 = vpack.c.b16 %v705, %v701
    %v942 = vpack.c.b16 %v706, %v702
    %v943 = vpack.c.b16 %v707, %v703
    %v944 = vpack.c.b16 %v708, %v704
    %v945 = vpack.c.b16 %v713, %v709
    %v946 = vpack.c.b16 %v714, %v710
    %v947 = vpack.c.b16 %v715, %v711
    %v948 = vpack.c.b16 %v716, %v712
    %v949 = vpack.c.b16 %v721, %v717
    %v950 = vpack.c.b16 %v722, %v718
    %v951 = vpack.c.b16 %v723, %v719
    %v952 = vpack.c.b16 %v724, %v720
    %v953 = vpack.c.b16 %v729, %v725
    %v954 = vpack.c.b16 %v730, %v726
    %v955 = vpack.c.b16 %v731, %v727
    %v956 = vpack.c.b16 %v732, %v728
    %v957 = vpack.c.b16 %v737, %v733
    %v958 = vpack.c.b16 %v738, %v734
    %v959 = vpack.c.b16 %v739, %v735
    %v960 = vpack.c.b16 %v740, %v736
    %v961 = vpack.c.b16 %v745, %v741
    %v962 = vpack.c.b16 %v746, %v742
    %v963 = vpack.c.b16 %v747, %v743
    %v964 = vpack.c.b16 %v748, %v744
    %v965 = vpack.c.b16 %v753, %v749
    %v966 = vpack.c.b16 %v754, %v750
    %v967 = vpack.c.b16 %v755, %v751
    %v968 = vpack.c.b16 %v756, %v752
    %v969 = vpack.c.b16 %v761, %v757
    %v970 = vpack.c.b16 %v762, %v758
    %v971 = vpack.c.b16 %v763, %v759
    %v972 = vpack.c.b16 %v764, %v760
    %v973 = vpack.c.b16 %v769, %v765
    %v974 = vpack.c.b16 %v770, %v766
    %v975 = vpack.c.b16 %v771, %v767
    %v976 = vpack.c.b16 %v772, %v768
    %v977 = vpack.c.b16 %v777, %v773
    %v978 = vpack.c.b16 %v778, %v774
    %v979 = vpack.c.b16 %v779, %v775
    %v980 = vpack.c.b16 %v780, %v776
    %v981 = vpack.c.b16 %v785, %v781
    %v982 = vpack.c.b16 %v786, %v782
    %v983 = vpack.c.b16 %v787, %v783
    %v984 = vpack.c.b16 %v788, %v784
    %v985 = vpack.c.b16 %v793, %v789
    %v986 = vpack.c.b16 %v794, %v790
    %v987 = vpack.c.b16 %v795, %v791
    %v988 = vpack.c.b16 %v796, %v792
    %v989 = vpack.c.b16 %v801, %v797
    %v990 = vpack.c.b16 %v802, %v798
    %v991 = vpack.c.b16 %v803, %v799
    %v992 = vpack.c.b16 %v804, %v800
    %v993 = vpack.c.b16 %v809, %v805
    %v994 = vpack.c.b16 %v810, %v806
    %v995 = vpack.c.b16 %v811, %v807
    %v996 = vpack.c.b16 %v812, %v808
    %v997 = vpack.c.b16 %v817, %v813
    %v998 = vpack.c.b16 %v818, %v814
    %v999 = vpack.c.b16 %v819, %v815
    %v1000 = vpack.c.b16 %v820, %v816
    %v1001 = vpack.c.b16 %v825, %v821
    %v1002 = vpack.c.b16 %v826, %v822
    %v1003 = vpack.c.b16 %v827, %v823
    %v1004 = vpack.c.b16 %v828, %v824
    %v1005 = vpack.c.b16 %v833, %v829
    %v1006 = vpack.c.b16 %v834, %v830
    %v1007 = vpack.c.b16 %v835, %v831
    %v1008 = vpack.c.b16 %v836, %v832
    %v1009 = vpack.c.b16 %v841, %v837
    %v1010 = vpack.c.b16 %v842, %v838
    %v1011 = vpack.c.b16 %v843, %v839
    %v1012 = vpack.c.b16 %v844, %v840
    %v1013 = vpack.c.b16 %v849, %v845
    %v1014 = vpack.c.b16 %v850, %v846
    %v1015 = vpack.c.b16 %v851, %v847
    %v1016 = vpack.c.b16 %v852, %v848
    %v1017 = vpack.c.b16 %v857, %v853
    %v1018 = vpack.c.b16 %v858, %v854
    %v1019 = vpack.c.b16 %v859, %v855
    %v1020 = vpack.c.b16 %v860, %v856
    %v1021 = vpack.c.b16 %v865, %v861
    %v1022 = vpack.c.b16 %v866, %v862
    %v1023 = vpack.c.b16 %v867, %v863
    %v1024 = vpack.c.b16 %v868, %v864
    %v1025 = vpack.c.b16 %v873, %v869
    %v1026 = vpack.c.b16 %v874, %v870
    %v1027 = vpack.c.b16 %v875, %v871
    %v1028 = vpack.c.b16 %v876, %v872
    %v1029 = vpack.c.b16 %v881, %v877
    %v1030 = vpack.c.b16 %v882, %v878
    %v1031 = vpack.c.b16 %v883, %v879
    %v1032 = vpack.c.b16 %v884, %v880
    %v1033 = vpack.c.b16 %v889, %v885
    %v1034 = vpack.c.b16 %v890, %v886
    %v1035 = vpack.c.b16 %v891, %v887
    %v1036 = vpack.c.b16 %v892, %v888
    %v1037 = vpack.c.b16 %v897, %v893
    %v1038 = vpack.c.b16 %v898, %v894
    %v1039 = vpack.c.b16 %v899, %v895
    %v1040 = vpack.c.b16 %v900, %v896
    %v1041 = vpack.c.b16 %v905, %v901
    %v1042 = vpack.c.b16 %v906, %v902
    %v1043 = vpack.c.b16 %v907, %v903
    %v1044 = vpack.c.b16 %v908, %v904
    %v1045 = vpack.c.b16 %v913, %v909
    %v1046 = vpack.c.b16 %v914, %v910
    %v1047 = vpack.c.b16 %v915, %v911
    %v1048 = vpack.c.b16 %v916, %v912
    %v1049 = vpack.c.b16 %v921, %v917
    %v1050 = vpack.c.b16 %v922, %v918
    %v1051 = vpack.c.b16 %v923, %v919
    %v1052 = vpack.c.b16 %v924, %v920
    %1181 = vmatprep.subr.bf16.mxu0 %v926
    %1182 = vmatpush1.bf16.msra.mxu0 %v925
    %1183 = vmatprep.subr.bf16.mxu0 %v930
    %1184 = vmatpush1.bf16.msra.mxu0 %v929
    %1185 = vmatprep.subr.bf16.mxu0 %v934
    %1186 = vmatpush1.bf16.msra.mxu0 %v933
    %1187 = vmatprep.subr.bf16.mxu0 %v938
    %1188 = vmatpush1.bf16.msra.mxu0 %v937
    %1189 = vmatprep.subr.bf16.mxu0 %v942
    %1190 = vmatpush1.bf16.msra.mxu0 %v941
    %1191 = vmatprep.subr.bf16.mxu0 %v946
    %1192 = vmatpush1.bf16.msra.mxu0 %v945
    %1193 = vmatprep.subr.bf16.mxu0 %v950
    %1194 = vmatpush1.bf16.msra.mxu0 %v949
    %1195 = vmatprep.subr.bf16.mxu0 %v954
    %1196 = vmatpush1.bf16.msra.mxu0 %v953
    %1197 = vmatprep.subr.bf16.mxu0 %v958
    %1198 = vmatpush1.bf16.msra.mxu0 %v957
    %1199 = vmatprep.subr.bf16.mxu0 %v962
    %1200 = vmatpush1.bf16.msra.mxu0 %v961
    %1201 = vmatprep.subr.bf16.mxu0 %v966
    %1202 = vmatpush1.bf16.msra.mxu0 %v965
    %1203 = vmatprep.subr.bf16.mxu0 %v970
    %1204 = vmatpush1.bf16.msra.mxu0 %v969
    %1205 = vmatprep.subr.bf16.mxu0 %v974
    %1206 = vmatpush1.bf16.msra.mxu0 %v973
    %1207 = vmatprep.subr.bf16.mxu0 %v978
    %1208 = vmatpush1.bf16.msra.mxu0 %v977
    %1209 = vmatprep.subr.bf16.mxu0 %v982
    %1210 = vmatpush1.bf16.msra.mxu0 %v981
    %1211 = vmatprep.subr.bf16.mxu0 %v986
    %1212 = vmatpush1.bf16.msra.mxu0 %v985
    %1213 = vmatprep.mubr.bf16.mxu0 %v388
    %1214 = vmatmul.mubr.bf16.gmra.mrb[0].mxu0 %v387
    %v1215 = vpop.f32.mrb[0].mxu0
    %v1216 = vadd.f32 %v524, %v1215
    %v1217 = vpop.f32.mrb[0].mxu0
    %v1218 = vadd.f32 %v528, %v1217
    %v1219 = vpop.f32.mrb[0].mxu0
    %v1220 = vpop.f32.mrb[0].mxu0
    %1221 = vdwg.mxu0
    %1222 = vmatprep.subr.bf16.mxu0 %v990
    %1223 = vmatpush1.bf16.msra.mxu0 %v989
    %1224 = vmatprep.subr.bf16.mxu0 %v994
    %1225 = vmatpush1.bf16.msra.mxu0 %v993
    %1226 = vmatprep.subr.bf16.mxu0 %v998
    %1227 = vmatpush1.bf16.msra.mxu0 %v997
    %1228 = vmatprep.subr.bf16.mxu0 %v1002
    %1229 = vmatpush1.bf16.msra.mxu0 %v1001
    %1230 = vmatprep.subr.bf16.mxu0 %v1006
    %1231 = vmatpush1.bf16.msra.mxu0 %v1005
    %1232 = vmatprep.subr.bf16.mxu0 %v1010
    %1233 = vmatpush1.bf16.msra.mxu0 %v1009
    %1234 = vmatprep.subr.bf16.mxu0 %v1014
    %1235 = vmatpush1.bf16.msra.mxu0 %v1013
    %1236 = vmatprep.subr.bf16.mxu0 %v1018
    %1237 = vmatpush1.bf16.msra.mxu0 %v1017
    %1238 = vmatprep.subr.bf16.mxu0 %v1022
    %1239 = vmatpush1.bf16.msra.mxu0 %v1021
    %1240 = vmatprep.subr.bf16.mxu0 %v1026
    %1241 = vmatpush1.bf16.msra.mxu0 %v1025
    %1242 = vmatprep.subr.bf16.mxu0 %v1030
    %1243 = vmatpush1.bf16.msra.mxu0 %v1029
    %1244 = vmatprep.subr.bf16.mxu0 %v1034
    %1245 = vmatpush1.bf16.msra.mxu0 %v1033
    %1246 = vmatprep.subr.bf16.mxu0 %v1038
    %1247 = vmatpush1.bf16.msra.mxu0 %v1037
    %1248 = vmatprep.subr.bf16.mxu0 %v1042
    %1249 = vmatpush1.bf16.msra.mxu0 %v1041
    %1250 = vmatprep.subr.bf16.mxu0 %v1046
    %1251 = vmatpush1.bf16.msra.mxu0 %v1045
    %1252 = vmatprep.subr.bf16.mxu0 %v1050
    %1253 = vmatpush1.bf16.msra.mxu0 %v1049
    %1254 = vmatprep.mubr.bf16.mxu0 %v390
    %1255 = vmatmul.mubr.bf16.gmra.mrb[0].mxu0 %v389
    %v1256 = vpop.f32.mrb[0].mxu0
    %v1257 = vadd.f32 %v1216, %v1256
    %v1258 = vpop.f32.mrb[0].mxu0
    %v1259 = vadd.f32 %v1218, %v1258
    %v1260 = vpop.f32.mrb[0].mxu0
    %v1261 = vpop.f32.mrb[0].mxu0
    %1262 = vdwg.mxu0
    %1263 = vmatprep.subr.bf16.mxu0 %v928
    %1264 = vmatpush1.bf16.msra.mxu0 %v927
    %1265 = vmatprep.subr.bf16.mxu0 %v932
    %1266 = vmatpush1.bf16.msra.mxu0 %v931
    %1267 = vmatprep.subr.bf16.mxu0 %v936
    %1268 = vmatpush1.bf16.msra.mxu0 %v935
    %1269 = vmatprep.subr.bf16.mxu0 %v940
    %1270 = vmatpush1.bf16.msra.mxu0 %v939
    %1271 = vmatprep.subr.bf16.mxu0 %v944
    %1272 = vmatpush1.bf16.msra.mxu0 %v943
    %1273 = vmatprep.subr.bf16.mxu0 %v948
    %1274 = vmatpush1.bf16.msra.mxu0 %v947
    %1275 = vmatprep.subr.bf16.mxu0 %v952
    %1276 = vmatpush1.bf16.msra.mxu0 %v951
    %1277 = vmatprep.subr.bf16.mxu0 %v956
    %1278 = vmatpush1.bf16.msra.mxu0 %v955
    %1279 = vmatprep.subr.bf16.mxu0 %v960
    %1280 = vmatpush1.bf16.msra.mxu0 %v959
    %1281 = vmatprep.subr.bf16.mxu0 %v964
    %1282 = vmatpush1.bf16.msra.mxu0 %v963
    %1283 = vmatprep.subr.bf16.mxu0 %v968
    %1284 = vmatpush1.bf16.msra.mxu0 %v967
    %1285 = vmatprep.subr.bf16.mxu0 %v972
    %1286 = vmatpush1.bf16.msra.mxu0 %v971
    %1287 = vmatprep.subr.bf16.mxu0 %v976
    %1288 = vmatpush1.bf16.msra.mxu0 %v975
    %1289 = vmatprep.subr.bf16.mxu0 %v980
    %1290 = vmatpush1.bf16.msra.mxu0 %v979
    %1291 = vmatprep.subr.bf16.mxu0 %v984
    %1292 = vmatpush1.bf16.msra.mxu0 %v983
    %1293 = vmatprep.subr.bf16.mxu0 %v988
    %1294 = vmatpush1.bf16.msra.mxu0 %v987
    %1295 = vmatprep.mubr.bf16.mxu0 %v388
    %1296 = vmatmul.mubr.bf16.gmra.mrb[0].mxu0 %v387
    %v1297 = vpop.f32.mrb[0].mxu0
    %v1298 = vadd.f32 %v532, %v1297
    %v1299 = vpop.f32.mrb[0].mxu0
    %v1300 = vadd.f32 %v536, %v1299
    %v1301 = vpop.f32.mrb[0].mxu0
    %v1302 = vpop.f32.mrb[0].mxu0
    %1303 = vdwg.mxu0
    %1304 = vmatprep.subr.bf16.mxu0 %v992
    %1305 = vmatpush1.bf16.msra.mxu0 %v991
    %1306 = vmatprep.subr.bf16.mxu0 %v996
    %1307 = vmatpush1.bf16.msra.mxu0 %v995
    %1308 = vmatprep.subr.bf16.mxu0 %v1000
    %1309 = vmatpush1.bf16.msra.mxu0 %v999
    %1310 = vmatprep.subr.bf16.mxu0 %v1004
    %1311 = vmatpush1.bf16.msra.mxu0 %v1003
    %1312 = vmatprep.subr.bf16.mxu0 %v1008
    %1313 = vmatpush1.bf16.msra.mxu0 %v1007
    %1314 = vmatprep.subr.bf16.mxu0 %v1012
    %1315 = vmatpush1.bf16.msra.mxu0 %v1011
    %1316 = vmatprep.subr.bf16.mxu0 %v1016
    %1317 = vmatpush1.bf16.msra.mxu0 %v1015
    %1318 = vmatprep.subr.bf16.mxu0 %v1020
    %1319 = vmatpush1.bf16.msra.mxu0 %v1019
    %1320 = vmatprep.subr.bf16.mxu0 %v1024
    %1321 = vmatpush1.bf16.msra.mxu0 %v1023
    %1322 = vmatprep.subr.bf16.mxu0 %v1028
    %1323 = vmatpush1.bf16.msra.mxu0 %v1027
    %1324 = vmatprep.subr.bf16.mxu0 %v1032
    %1325 = vmatpush1.bf16.msra.mxu0 %v1031
    %1326 = vmatprep.subr.bf16.mxu0 %v1036
    %1327 = vmatpush1.bf16.msra.mxu0 %v1035
    %1328 = vmatprep.subr.bf16.mxu0 %v1040
    %1329 = vmatpush1.bf16.msra.mxu0 %v1039
    %1330 = vmatprep.subr.bf16.mxu0 %v1044
    %1331 = vmatpush1.bf16.msra.mxu0 %v1043
    %1332 = vmatprep.subr.bf16.mxu0 %v1048
    %1333 = vmatpush1.bf16.msra.mxu0 %v1047
    %1334 = vmatprep.subr.bf16.mxu0 %v1052
    %1335 = vmatpush1.bf16.msra.mxu0 %v1051
    %1336 = vmatprep.mubr.bf16.mxu0 %v390
    %1337 = vmatmul.mubr.bf16.gmra.mrb[0].mxu0 %v389
    %v1338 = vpop.f32.mrb[0].mxu0
    %v1339 = vadd.f32 %v1298, %v1338
    %v1340 = vpop.f32.mrb[0].mxu0
    %v1341 = vadd.f32 %v1300, %v1340
    %v1342 = vpop.f32.mrb[0].mxu0
    %v1343 = vpop.f32.mrb[0].mxu0
    %1344 = vdwg.mxu0
    %v1349 = vcombine.low %v1257, %v1259
    %v1350 = vcombine.low %v1339, %v1341
    %v1352 = vunpack.c.l.s4 1983009808
    %v1353 = vunpack.c.0.s8 %v1352
    %v1354 = vlaneseq
    %v1355 = vshrl.u32 %v1354, 7
    %v1356 = vsub.s32 %v1353, %v1355
    %v1357 = vrot.slane %v1349, %v1356
    %v1359 = vunpack.c.l.s4 1983009808
    %v1360 = vunpack.c.0.s8 %v1359
    %v1361 = vlaneseq
    %v1362 = vshrl.u32 %v1361, 7
    %v1363 = vsub.s32 %v1360, %v1362
    %v1364 = vrot.slane %v1350, %v1363
    %v1365 = vcombine.low %v1357, %v1364
    %1367 = vst [vmem:[#allocation8] sm:$0xff] %v1365
    // Predicated region
    $region34: #{tpu_custom_call.1} parent=1 // pred_check
      _
    $region35: #{tpu_custom_call.1} parent=1 // pred_check_branch
      %1369 = sbr.rel (0) target = $region37
    $region36: #{tpu_custom_call.1} parent=1 // pred_region
      %s1371 = ssub.s32 128, 128
      %1372 = vsyncadd [#allocation4], %s1371
      %s1374 = sshll.u32 [#allocation8], 4
      %s1375 = int_to_ptr.vmem [resolvable:$true] %s1374
      %1377 = dma.vmem_to_hbm [thread:$0]  %s1375, 128, %s5, [#allocation4]
    $region37: #{tpu_custom_call.1} parent=1 // pred_fallthru
      _
    // Predicated region
    $region38: #{tpu_custom_call.1} parent=1 // pred_check
      _
    $region39: #{tpu_custom_call.1} parent=1 // pred_check_branch
      %1379 = sbr.rel (0) target = $region41
    $region40: #{tpu_custom_call.1} parent=1 // pred_region
      %1380 = dma.done [#allocation4], 128
    $region41: #{tpu_custom_call.1} parent=1 // pred_fallthru
      _
    %1381 = vsyncpa [#allocation3], 1
    %1382 = vsyncpa [#allocation6], 1
    %1383 = vsyncpa [#allocation4], 1

</llo_original>
